<compile_context>
chip_gen: v5e
topology: v5e:2x2
jax: 0.10.0
libtpu: 0.0.40
codegen_flags: <defaults>
</compile_context>

<pallas_src>
import math

import jax
import jax.numpy as jnp
from jax.experimental import pallas as pl
from jax.experimental.pallas import tpu as pltpu


# ----------------------------------------------------------------------------
# Fused kernel: linear(query) -> scores -> masked softmax -> output
# ----------------------------------------------------------------------------
def _linear_attention_kernel(q_ref, k_ref, v_ref, m_ref, w_ref, b_ref,
                             out_ref, score_ref):
    bb, lq, dk = q_ref.shape
    q = q_ref[...]                        # (bb, Lq, Dk)  f32
    k = k_ref[...]                        # (bb, Lk, Dk)  f32
    v = v_ref[...]                        # (bb, Lk, Dv)  f32
    m = m_ref[...].astype(jnp.float32)    # (bb, Lq, Lk)  0.0 / 1.0

    # Query projection, fused in-kernel (projected query never touches HBM).
    # Fold the batch rows into the sublane dim for one lane-dense 2-D matmul.
    q2 = q.reshape(bb * lq, dk)
    qp = (jnp.dot(q2, w_ref[...], preferred_element_type=jnp.float32)
          + b_ref[...]).reshape(bb, lq, dk)

    # Scores: batched Q' K^T  (this module applies NO 1/sqrt(d_k) scaling).
    s = jnp.einsum("bqd,bkd->bqk", qp, k, preferred_element_type=jnp.float32)

    # torch masked_fill_(mask, 0.0): masked logits become 0.0 BEFORE softmax,
    # so masked positions still contribute exp(0 - max) to the denominator.
    s = jnp.where(m != 0.0, jnp.float32(0.0), s)

    # Softmax over the key axis; reciprocal goes to the otherwise-idle EUP.
    s_max = jnp.max(s, axis=-1, keepdims=True)
    e = jnp.exp(s - s_max)
    inv = pl.reciprocal(jnp.sum(e, axis=-1, keepdims=True), approx=False)
    p = e * inv

    score_ref[...] = p.astype(score_ref.dtype)
    out_ref[...] = jnp.einsum(
        "bqk,bkv->bqv", p, v, preferred_element_type=jnp.float32
    ).astype(out_ref.dtype)


def _pick_block_batch(flat_b, max_block):
    divisors = [d for d in range(1, min(flat_b, max_block) + 1)
                if flat_b % d == 0]
    # Prefer the largest block that still leaves >=2 grid steps so both v7x
    # TensorCores get work; otherwise just take the largest divisor.
    multi = [d for d in divisors if flat_b // d >= 2]
    return max(multi) if multi else max(divisors)


# ----------------------------------------------------------------------------
# Wrapper: handles (B, Lq, D) or (B, H, Lq, D) layouts, no transposes.
# ----------------------------------------------------------------------------
def linear_attention(query, key, value, mask, w, b, *, max_block_batch=4):
    """query: (..., Lq, Dk), key: (..., Lk, Dk), value: (..., Lk, Dv),
    mask: (..., Lq, Lk) bool. w: (Dk, Dk) = nn.Linear weight transposed
    (in, out); b: (1, Dk)."""
    *batch_dims, lq, dk = query.shape
    lk = key.shape[-2]
    dv = value.shape[-1]
    fb = 1
    for d in batch_dims:
        fb *= d

    q = query.reshape(fb, lq, dk)
    k = key.reshape(fb, lk, dk)
    v = value.reshape(fb, lk, dv)
    m = mask.reshape(fb, lq, lk).astype(jnp.int8)   # 4x less DMA than int32

    bb = _pick_block_batch(fb, max_block_batch)
    grid = (fb // bb,)

    out, score = pl.pallas_call(
        _linear_attention_kernel,
        grid=grid,
        in_specs=[
            pl.BlockSpec((bb, lq, dk), lambda i: (i, 0, 0)),
            pl.BlockSpec((bb, lk, dk), lambda i: (i, 0, 0)),
            pl.BlockSpec((bb, lk, dv), lambda i: (i, 0, 0)),
            pl.BlockSpec((bb, lq, lk), lambda i: (i, 0, 0)),
            pl.BlockSpec((dk, dk), lambda i: (0, 0)),   # weight: constant block
            pl.BlockSpec((1, dk), lambda i: (0, 0)),    # bias:   constant block
        ],
        out_specs=[
            pl.BlockSpec((bb, lq, dv), lambda i: (i, 0, 0)),
            pl.BlockSpec((bb, lq, lk), lambda i: (i, 0, 0)),
        ],
        out_shape=[
            jax.ShapeDtypeStruct((fb, lq, dv), query.dtype),
            jax.ShapeDtypeStruct((fb, lq, lk), query.dtype),
        ],
        compiler_params=pltpu.CompilerParams(
            dimension_semantics=("parallel",),
        ),
    )(q, k, v, m, w, b)

    out = out.reshape(*batch_dims, lq, dv)
    score = score.reshape(*batch_dims, lq, lk)
    return out, score


# ----------------------------------------------------------------------------
# Pure-JAX reference (mirrors the PyTorch module)
# ----------------------------------------------------------------------------
def reference_linear_attention(query, key, value, mask, w, b):
    score = jnp.einsum("...qd,de->...qe", query, w) + b
    score = jnp.einsum("...qe,...ke->...qk", score, key)
    score = jnp.where(mask, 0.0, score)
    score = jax.nn.softmax(score, axis=-1)
    result = jnp.einsum("...qk,...kv->...qv", score, value)
    return result, score


if __name__ == "__main__":
    # Small shapes consistent with the module's forward: (B, n_head, L, D).
    B, H, Lq, Lk = 2, 4, 8, 8
    key_size, value_size = 32, 32

    root = jax.random.PRNGKey(0)
    ks = jax.random.split(root, 6)

    bound = 1.0 / math.sqrt(key_size)
    # W stored as (in, out) == transpose of the PyTorch nn.Linear weight.
    W = jax.random.uniform(ks[0], (key_size, key_size), jnp.float32, -bound, bound)
    bias = jax.random.uniform(ks[1], (1, key_size), jnp.float32, -bound, bound)

    query = jax.random.normal(ks[2], (B, H, Lq, key_size), jnp.float32)
    key = jax.random.normal(ks[3], (B, H, Lk, key_size), jnp.float32)
    value = jax.random.normal(ks[4], (B, H, Lk, value_size), jnp.float32)
    mask = jax.random.bernoulli(ks[5], 0.3, (B, H, Lq, Lk))

    # 4-D (batched + heads) path.
    result, score = linear_attention(query, key, value, mask, W, bias)
    result = jax.block_until_ready(result)
    score = jax.block_until_ready(score)

    ref_result, ref_score = reference_linear_attention(query, key, value, mask, W, bias)
    assert result.shape == (B, H, Lq, value_size)
    assert score.shape == (B, H, Lq, Lk)
    assert jnp.allclose(result, ref_result, atol=1e-4, rtol=1e-4)
    assert jnp.allclose(score, ref_score, atol=1e-5, rtol=1e-5)

    # 3-D (no head dim) path, as also allowed by the module signature.
    q3, k3, v3, m3 = query[:, 0], key[:, 0], value[:, 0], mask[:, 0]
    r3, s3 = linear_attention(q3, k3, v3, m3, W, bias)
    r3 = jax.block_until_ready(r3)
    s3 = jax.block_until_ready(s3)
    rr3, rs3 = reference_linear_attention(q3, k3, v3, m3, W, bias)
    assert r3.shape == (B, Lq, value_size) and s3.shape == (B, Lq, Lk)
    assert jnp.allclose(r3, rr3, atol=1e-4, rtol=1e-4)
    assert jnp.allclose(s3, rs3, atol=1e-5, rtol=1e-5)

    print("KERNEL_OK")
</pallas_src>

<mosaic_0001>
module attributes {stable_mosaic.version = 11 : i64} {
  func.func @_linear_attention_kernel(%arg0: i32, %arg1: memref<4x8x32xf32, #tpu.memory_space<vmem>>, %arg2: memref<4x8x32xf32, #tpu.memory_space<vmem>>, %arg3: memref<4x8x32xf32, #tpu.memory_space<vmem>>, %arg4: memref<4x8x8xi8, #tpu.memory_space<vmem>>, %arg5: memref<32x32xf32, #tpu.memory_space<vmem>>, %arg6: memref<1x32xf32, #tpu.memory_space<vmem>>, %arg7: memref<4x8x32xf32, #tpu.memory_space<vmem>>, %arg8: memref<4x8x8xf32, #tpu.memory_space<vmem>>) attributes {dimension_semantics = [#tpu.dimension_semantics<parallel>], iteration_bounds = array<i64: 2>, scalar_prefetch = 0 : i64, scratch_operands = 0 : i64, tpu.core_type = #tpu.core_type<tc>, window_params = [{transform_indices = @transform_0, window_bounds = array<i64: 4, 8, 32>}, {transform_indices = @transform_1, window_bounds = array<i64: 4, 8, 32>}, {transform_indices = @transform_2, window_bounds = array<i64: 4, 8, 32>}, {transform_indices = @transform_3, window_bounds = array<i64: 4, 8, 8>}, {pipeline_mode = #tpu.pipeline_mode<synchronous>, transform_indices = @transform_4, window_bounds = array<i64: 32, 32>}, {pipeline_mode = #tpu.pipeline_mode<synchronous>, transform_indices = @transform_5, window_bounds = array<i64: 1, 32>}, {transform_indices = @transform_6, window_bounds = array<i64: 4, 8, 32>}, {transform_indices = @transform_7, window_bounds = array<i64: 4, 8, 8>}]} {
    %c0 = arith.constant 0 : index
    %c0_0 = arith.constant 0 : index
    %c0_1 = arith.constant 0 : index
    %0 = vector.load %arg1[%c0, %c0_0, %c0_1] : memref<4x8x32xf32, #tpu.memory_space<vmem>>, vector<4x8x32xf32>
    %c0_2 = arith.constant 0 : index
    %c0_3 = arith.constant 0 : index
    %c0_4 = arith.constant 0 : index
    %1 = vector.load %arg2[%c0_2, %c0_3, %c0_4] : memref<4x8x32xf32, #tpu.memory_space<vmem>>, vector<4x8x32xf32>
    %c0_5 = arith.constant 0 : index
    %c0_6 = arith.constant 0 : index
    %c0_7 = arith.constant 0 : index
    %2 = vector.load %arg3[%c0_5, %c0_6, %c0_7] : memref<4x8x32xf32, #tpu.memory_space<vmem>>, vector<4x8x32xf32>
    %c0_8 = arith.constant 0 : index
    %c0_9 = arith.constant 0 : index
    %c0_10 = arith.constant 0 : index
    %3 = vector.load %arg4[%c0_8, %c0_9, %c0_10] : memref<4x8x8xi8, #tpu.memory_space<vmem>>, vector<4x8x8xi8>
    %4 = arith.sitofp %3 : vector<4x8x8xi8> to vector<4x8x8xf32>
    %5 = vector.shape_cast %0 : vector<4x8x32xf32> to vector<32x32xf32>
    %c0_11 = arith.constant 0 : index
    %c0_12 = arith.constant 0 : index
    %6 = vector.load %arg5[%c0_11, %c0_12] : memref<32x32xf32, #tpu.memory_space<vmem>>, vector<32x32xf32>
    %cst = arith.constant dense<0.000000e+00> : vector<32x32xf32>
    %7 = tpu.matmul %5, %6, %cst {dimension_numbers = #tpu.dot_dimension_numbers<[1], [0], [0], [1], [0, 0, 1, 1], [], []>} : vector<32x32xf32>, vector<32x32xf32>, vector<32x32xf32> -> vector<32x32xf32>
    %c0_13 = arith.constant 0 : index
    %c0_14 = arith.constant 0 : index
    %8 = vector.load %arg6[%c0_13, %c0_14] : memref<1x32xf32, #tpu.memory_space<vmem>>, vector<1x32xf32>
    %9 = vector.broadcast %8 : vector<1x32xf32> to vector<32x32xf32>
    %10 = arith.addf %7, %9 : vector<32x32xf32>
    %11 = vector.shape_cast %10 : vector<32x32xf32> to vector<4x8x32xf32>
    "tpu.trace_start"() <{level = 10 : i32, message = "bqd,bkd->bqk"}> : () -> ()
    %cst_15 = arith.constant dense<0.000000e+00> : vector<4x8x8xf32>
    %12 = tpu.matmul %11, %1, %cst_15 {dimension_numbers = #tpu.dot_dimension_numbers<[2], [2], [1], [1], [0, 0, 0, 1, 1, 1], [0], [0]>} : vector<4x8x32xf32>, vector<4x8x32xf32>, vector<4x8x8xf32> -> vector<4x8x8xf32>
    %cst_16 = arith.constant 0.000000e+00 : f32
    "tpu.trace_stop"() : () -> ()
    %13 = vector.broadcast %cst_16 : f32 to vector<4x8x8xf32>
    %14 = arith.cmpf one, %4, %13 : vector<4x8x8xf32>
    %cst_17 = arith.constant 0.000000e+00 : f32
    %15 = vector.broadcast %cst_17 : f32 to vector<4x8x8xf32>
    %16 = arith.select %14, %15, %12 : vector<4x8x8xi1>, vector<4x8x8xf32>
    %cst_18 = arith.constant dense<0xFF800000> : vector<4x8xf32>
    %17 = vector.multi_reduction <maximumf>, %16, %cst_18 [2] : vector<4x8x8xf32> to vector<4x8xf32>
    %18 = vector.shape_cast %17 : vector<4x8xf32> to vector<4x8x1xf32>
    %19 = vector.broadcast %18 : vector<4x8x1xf32> to vector<4x8x8xf32>
    %20 = arith.subf %16, %19 : vector<4x8x8xf32>
    %21 = math.exp %20 : vector<4x8x8xf32>
    %cst_19 = arith.constant dense<0.000000e+00> : vector<4x8xf32>
    %22 = vector.multi_reduction <add>, %21, %cst_19 [2] : vector<4x8x8xf32> to vector<4x8xf32>
    %23 = vector.shape_cast %22 : vector<4x8xf32> to vector<4x8x1xf32>
    %24 = tpu.reciprocal %23 : vector<4x8x1xf32> -> vector<4x8x1xf32>
    %25 = vector.broadcast %24 : vector<4x8x1xf32> to vector<4x8x8xf32>
    %26 = arith.mulf %21, %25 : vector<4x8x8xf32>
    %c0_20 = arith.constant 0 : index
    %c0_21 = arith.constant 0 : index
    %c0_22 = arith.constant 0 : index
    %27 = vector.load %arg8[%c0_20, %c0_21, %c0_22] : memref<4x8x8xf32, #tpu.memory_space<vmem>>, vector<4x8x8xf32>
    tpu.vector_store %arg8[%c0_20, %c0_21, %c0_22], %26 {strides = array<i32>} : memref<4x8x8xf32, #tpu.memory_space<vmem>>, vector<4x8x8xf32>,
    "tpu.trace_start"() <{level = 10 : i32, message = "bqk,bkv->bqv"}> : () -> ()
    %cst_23 = arith.constant dense<0.000000e+00> : vector<4x8x32xf32>
    %28 = tpu.matmul %26, %2, %cst_23 {dimension_numbers = #tpu.dot_dimension_numbers<[2], [1], [1], [2], [0, 0, 0, 1, 1, 2], [0], [0]>} : vector<4x8x8xf32>, vector<4x8x32xf32>, vector<4x8x32xf32> -> vector<4x8x32xf32>
    "tpu.trace_stop"() : () -> ()
    %c0_24 = arith.constant 0 : index
    %c0_25 = arith.constant 0 : index
    %c0_26 = arith.constant 0 : index
    %29 = vector.load %arg7[%c0_24, %c0_25, %c0_26] : memref<4x8x32xf32, #tpu.memory_space<vmem>>, vector<4x8x32xf32>
    tpu.vector_store %arg7[%c0_24, %c0_25, %c0_26], %28 {strides = array<i32>} : memref<4x8x32xf32, #tpu.memory_space<vmem>>, vector<4x8x32xf32>,
    return
  }
  func.func @transform_0(%arg0: i32) -> (i32, i32, i32) {
    %c0_i32 = arith.constant 0 : i32
    %c0_i32_0 = arith.constant 0 : i32
    %c0_i32_1 = arith.constant 0 : i32
    return %arg0, %c0_i32, %c0_i32_0 : i32, i32, i32
  }
  func.func @transform_1(%arg0: i32) -> (i32, i32, i32) {
    %c0_i32 = arith.constant 0 : i32
    %c0_i32_0 = arith.constant 0 : i32
    %c0_i32_1 = arith.constant 0 : i32
    return %arg0, %c0_i32, %c0_i32_0 : i32, i32, i32
  }
  func.func @transform_2(%arg0: i32) -> (i32, i32, i32) {
    %c0_i32 = arith.constant 0 : i32
    %c0_i32_0 = arith.constant 0 : i32
    %c0_i32_1 = arith.constant 0 : i32
    return %arg0, %c0_i32, %c0_i32_0 : i32, i32, i32
  }
  func.func @transform_3(%arg0: i32) -> (i32, i32, i32) {
    %c0_i32 = arith.constant 0 : i32
    %c0_i32_0 = arith.constant 0 : i32
    %c0_i32_1 = arith.constant 0 : i32
    return %arg0, %c0_i32, %c0_i32_0 : i32, i32, i32
  }
  func.func @transform_4(%arg0: i32) -> (i32, i32) {
    %c0_i32 = arith.constant 0 : i32
    %c0_i32_0 = arith.constant 0 : i32
    %c0_i32_1 = arith.constant 0 : i32
    return %c0_i32, %c0_i32_0 : i32, i32
  }
  func.func @transform_5(%arg0: i32) -> (i32, i32) {
    %c0_i32 = arith.constant 0 : i32
    %c0_i32_0 = arith.constant 0 : i32
    %c0_i32_1 = arith.constant 0 : i32
    return %c0_i32, %c0_i32_0 : i32, i32
  }
  func.func @transform_6(%arg0: i32) -> (i32, i32, i32) {
    %c0_i32 = arith.constant 0 : i32
    %c0_i32_0 = arith.constant 0 : i32
    %c0_i32_1 = arith.constant 0 : i32
    return %arg0, %c0_i32, %c0_i32_0 : i32, i32, i32
  }
  func.func @transform_7(%arg0: i32) -> (i32, i32, i32) {
    %c0_i32 = arith.constant 0 : i32
    %c0_i32_0 = arith.constant 0 : i32
    %c0_i32_1 = arith.constant 0 : i32
    return %arg0, %c0_i32, %c0_i32_0 : i32, i32, i32
  }
}

</mosaic_0001>

<llo_original>
// kernel: tpu_custom_call.1
$region0: #{tpu_custom_call.1}
  #allocation0 [shape = 'u32[]', space=smem, size = 0x4, offset = 0x4, fixed_abs, tag = 'smem constant byte address 0x4 - core index']
  #allocation1 [shape = 'u32[72,128]{1,0:T(1,128)}', space=vmem, size = 0x9000, scoped, tag = 'internal scratch']
  %s0 = inlined_call_operand.hbm [shape: f32[8,8,32], index: 0, kind: input, shape index: {}]
  %s1 = inlined_call_operand.hbm [shape: f32[8,8,32], index: 1, kind: input, shape index: {}]
  %s2 = inlined_call_operand.hbm [shape: f32[8,8,32], index: 2, kind: input, shape index: {}]
  %s3 = inlined_call_operand.hbm [shape: s8[8,8,8], index: 3, kind: input, shape index: {}]
  %s4 = inlined_call_operand.hbm [shape: f32[32,32], index: 4, kind: input, shape index: {}]
  %s5 = inlined_call_operand.vmem [shape: f32[1,32], index: 5, kind: input, shape index: {}]
  %s6 = inlined_call_operand.hbm [shape: f32[8,8,32], index: 6, kind: output, shape index: {0}]
  %s7 = inlined_call_operand.hbm [shape: f32[8,8,8], index: 7, kind: output, shape index: {1}]
  %8 = xla_tuple %s6, %s7
  %s9 = sld [smem:[#allocation0]]
  $region85: #{tpu_custom_call.1} parent=0
    _
  %s11 = ssub.s32 1, %s9
  %s12 = scalar_select 0, %s11, %s9
  $region1: #{tpu_custom_call.1} parent=0
    #allocation2 [shape = 'u8[32768]{0}', space=vmem, size = 0x8000, scoped, tag = 'input window, operand 0']
    #allocation3 [shape = 's32[2]{0}', space=sflag, size = 0x8, scoped, tag = 'scoped memory for tpu_custom_call.1']
    #allocation4 [shape = 's32[2]{0}', space=sflag, size = 0x8, scoped, tag = 'scoped memory for tpu_custom_call.1']
    #allocation5 [shape = 'u8[32768]{0}', space=vmem, size = 0x8000, scoped, tag = 'input window, operand 1']
    #allocation6 [shape = 's32[2]{0}', space=sflag, size = 0x8, scoped, tag = 'scoped memory for tpu_custom_call.1']
    #allocation7 [shape = 'u8[32768]{0}', space=vmem, size = 0x8000, scoped, tag = 'input window, operand 2']
    #allocation8 [shape = 'u8[8192]{0}', space=vmem, size = 0x2000, scoped, tag = 'input window, operand 3']
    #allocation9 [shape = 's32[2]{0}', space=sflag, size = 0x8, scoped, tag = 'scoped memory for tpu_custom_call.1']
    #allocation10 [shape = 'u8[16384]{0}', space=vmem, size = 0x4000, scoped, tag = 'input window, operand 4, single buffered']
    #allocation11 [shape = 'u8[32768]{0}', space=vmem, size = 0x8000, scoped, tag = 'output window, operand 0']
    #allocation12 [shape = 'u8[32768]{0}', space=vmem, size = 0x8000, scoped, tag = 'output window, operand 1']
    #allocation13 [shape = 's32[2]{0}', space=sflag, size = 0x8, scoped, tag = 'scoped memory for tpu_custom_call.1']
    %13 = vsyncpa [#allocation3], 0
    %s14 = scalar_lea.sflag [#allocation3], 1
    %15 = vsyncpa %s14, 0
    %16 = vsyncpa [#allocation6], 0
    %s17 = scalar_lea.sflag [#allocation6], 1
    %18 = vsyncpa %s17, 0
    %19 = vsyncpa [#allocation9], 0
    %s20 = scalar_lea.sflag [#allocation9], 1
    %21 = vsyncpa %s20, 0
    %22 = vsyncpa [#allocation4], 0
    %s23 = scalar_lea.sflag [#allocation4], 1
    %24 = vsyncpa %s23, 0
    %25 = vsyncpa [#allocation13], 0
    %s26 = scalar_lea.sflag [#allocation13], 1
    %27 = vsyncpa %s26, 0
    loop: start=0, step=1, limit=4
    $region2: #{tpu_custom_call.1} parent=1 // loop_pre_header
      _
    $region3: #{tpu_custom_call.1} parent=1 // loop_header
      %s29 = sphi 0, %s33
      %p30 = scmp.ge.s32.totalorder %s29, 4
      %s39 = sphi 0, %s41
      %s42 = sphi 0, %s39
      %s43 = sphi 0, %s42
      %s59 = sphi 0, %s43
      %s65 = sphi 0, %s67
      %s68 = sphi 0, %s65
      %s69 = sphi 0, %s68
      %s85 = sphi 0, %s69
      %s91 = sphi 0, %s93
      %s94 = sphi 0, %s91
      %s95 = sphi 0, %s94
      %s111 = sphi 0, %s95
      %s117 = sphi 0, %s119
      %s120 = sphi 0, %s117
      %s121 = sphi 0, %s120
      %s137 = sphi 0, %s121
      %s141 = sphi 0, %s141
      %s143 = sphi 0, %s141
      %s144 = sphi 0, %s143
      %s158 = sphi 0, %s144
      %s162 = sphi 0, %s162
      %s164 = sphi 0, %s162
      %s165 = sphi 0, %s164
      %s179 = sphi 0, %s165
      %s185 = sphi 0, %s187
      %s188 = sphi 0, %s185
      %s189 = sphi 0, %s188
      %s205 = sphi 0, %s189
      %s211 = sphi 0, %s213
      %s214 = sphi 0, %s211
      %s215 = sphi 0, %s214
      %s231 = sphi 0, %s215
    $region4: #{tpu_custom_call.1} parent=1 // loop_header_branch
      %32 = sbr.rel (%p30) target = $region8
    $region5: #{tpu_custom_call.1} parent=1 // loop_body
      %s34 = ssub.s32 %s29, 1
      %s35 = ssub.s32 %s29, 2
      %s36 = sadd.s32 %s29, 1
      %s37 = ssub.s32 %s29, %s36
      %p38 = scmp.eq.s32.totalorder %s37, 0
      %s40 = sadd.s32 %s39, 1
      %s41 = scalar_select %p38, %s39, %s40
      %p44 = pneg %p38
      %p45 = scmp.eq.s32.totalorder %s29, 1
      %p46 = por %p44, %p45
      %p47 = scmp.ne.s32.totalorder %s39, %s42
      %p48 = scmp.eq.s32.totalorder %s29, 0
      %p49 = por %p47, %p48
      %p50 = scmp.ne.s32.totalorder %s39, %s42
      %p51 = scmp.eq.s32.totalorder %s34, 1
      %p52 = por %p50, %p51
      %p53 = scmp.ne.s32.totalorder %s42, %s43
      %p54 = scmp.eq.s32.totalorder %s34, 0
      %p55 = por %p53, %p54
      %p56 = scmp.ne.s32.totalorder %s42, %s43
      %p57 = scmp.eq.s32.totalorder %s35, 1
      %p58 = por %p56, %p57
      %p60 = scmp.ne.s32.totalorder %s43, %s59
      %p61 = scmp.eq.s32.totalorder %s35, 0
      %p62 = por %p60, %p61
      %s63 = ssub.s32 %s29, %s36
      %p64 = scmp.eq.s32.totalorder %s63, 0
      %s66 = sadd.s32 %s65, 1
      %s67 = scalar_select %p64, %s65, %s66
      %p70 = pneg %p64
      %p71 = scmp.eq.s32.totalorder %s29, 1
      %p72 = por %p70, %p71
      %p73 = scmp.ne.s32.totalorder %s65, %s68
      %p74 = scmp.eq.s32.totalorder %s29, 0
      %p75 = por %p73, %p74
      %p76 = scmp.ne.s32.totalorder %s65, %s68
      %p77 = scmp.eq.s32.totalorder %s34, 1
      %p78 = por %p76, %p77
      %p79 = scmp.ne.s32.totalorder %s68, %s69
      %p80 = scmp.eq.s32.totalorder %s34, 0
      %p81 = por %p79, %p80
      %p82 = scmp.ne.s32.totalorder %s68, %s69
      %p83 = scmp.eq.s32.totalorder %s35, 1
      %p84 = por %p82, %p83
      %p86 = scmp.ne.s32.totalorder %s69, %s85
      %p87 = scmp.eq.s32.totalorder %s35, 0
      %p88 = por %p86, %p87
      %s89 = ssub.s32 %s29, %s36
      %p90 = scmp.eq.s32.totalorder %s89, 0
      %s92 = sadd.s32 %s91, 1
      %s93 = scalar_select %p90, %s91, %s92
      %p96 = pneg %p90
      %p97 = scmp.eq.s32.totalorder %s29, 1
      %p98 = por %p96, %p97
      %p99 = scmp.ne.s32.totalorder %s91, %s94
      %p100 = scmp.eq.s32.totalorder %s29, 0
      %p101 = por %p99, %p100
      %p102 = scmp.ne.s32.totalorder %s91, %s94
      %p103 = scmp.eq.s32.totalorder %s34, 1
      %p104 = por %p102, %p103
      %p105 = scmp.ne.s32.totalorder %s94, %s95
      %p106 = scmp.eq.s32.totalorder %s34, 0
      %p107 = por %p105, %p106
      %p108 = scmp.ne.s32.totalorder %s94, %s95
      %p109 = scmp.eq.s32.totalorder %s35, 1
      %p110 = por %p108, %p109
      %p112 = scmp.ne.s32.totalorder %s95, %s111
      %p113 = scmp.eq.s32.totalorder %s35, 0
      %p114 = por %p112, %p113
      %s115 = ssub.s32 %s29, %s36
      %p116 = scmp.eq.s32.totalorder %s115, 0
      %s118 = sadd.s32 %s117, 1
      %s119 = scalar_select %p116, %s117, %s118
      %p122 = pneg %p116
      %p123 = scmp.eq.s32.totalorder %s29, 1
      %p124 = por %p122, %p123
      %p125 = scmp.ne.s32.totalorder %s117, %s120
      %p126 = scmp.eq.s32.totalorder %s29, 0
      %p127 = por %p125, %p126
      %p128 = scmp.ne.s32.totalorder %s117, %s120
      %p129 = scmp.eq.s32.totalorder %s34, 1
      %p130 = por %p128, %p129
      %p131 = scmp.ne.s32.totalorder %s120, %s121
      %p132 = scmp.eq.s32.totalorder %s34, 0
      %p133 = por %p131, %p132
      %p134 = scmp.ne.s32.totalorder %s120, %s121
      %p135 = scmp.eq.s32.totalorder %s35, 1
      %p136 = por %p134, %p135
      %p138 = scmp.ne.s32.totalorder %s121, %s137
      %p139 = scmp.eq.s32.totalorder %s35, 0
      %p140 = por %p138, %p139
      %s142 = sadd.s32 %s141, 1
      %p145 = scmp.eq.s32.totalorder %s29, 1
      %p146 = scmp.ne.s32.totalorder %s141, %s143
      %p147 = scmp.eq.s32.totalorder %s29, 0
      %p148 = por %p146, %p147
      %p149 = scmp.ne.s32.totalorder %s141, %s143
      %p150 = scmp.eq.s32.totalorder %s34, 1
      %p151 = por %p149, %p150
      %p152 = scmp.ne.s32.totalorder %s143, %s144
      %p153 = scmp.eq.s32.totalorder %s34, 0
      %p154 = por %p152, %p153
      %p155 = scmp.ne.s32.totalorder %s143, %s144
      %p156 = scmp.eq.s32.totalorder %s35, 1
      %p157 = por %p155, %p156
      %p159 = scmp.ne.s32.totalorder %s144, %s158
      %p160 = scmp.eq.s32.totalorder %s35, 0
      %p161 = por %p159, %p160
      %s163 = sadd.s32 %s162, 1
      %p166 = scmp.eq.s32.totalorder %s29, 1
      %p167 = scmp.ne.s32.totalorder %s162, %s164
      %p168 = scmp.eq.s32.totalorder %s29, 0
      %p169 = por %p167, %p168
      %p170 = scmp.ne.s32.totalorder %s162, %s164
      %p171 = scmp.eq.s32.totalorder %s34, 1
      %p172 = por %p170, %p171
      %p173 = scmp.ne.s32.totalorder %s164, %s165
      %p174 = scmp.eq.s32.totalorder %s34, 0
      %p175 = por %p173, %p174
      %p176 = scmp.ne.s32.totalorder %s164, %s165
      %p177 = scmp.eq.s32.totalorder %s35, 1
      %p178 = por %p176, %p177
      %p180 = scmp.ne.s32.totalorder %s165, %s179
      %p181 = scmp.eq.s32.totalorder %s35, 0
      %p182 = por %p180, %p181
      %s183 = ssub.s32 %s29, %s36
      %p184 = scmp.eq.s32.totalorder %s183, 0
      %s186 = sadd.s32 %s185, 1
      %s187 = scalar_select %p184, %s185, %s186
      %p190 = pneg %p184
      %p191 = scmp.eq.s32.totalorder %s29, 1
      %p192 = por %p190, %p191
      %p193 = scmp.ne.s32.totalorder %s185, %s188
      %p194 = scmp.eq.s32.totalorder %s29, 0
      %p195 = por %p193, %p194
      %p196 = scmp.ne.s32.totalorder %s185, %s188
      %p197 = scmp.eq.s32.totalorder %s34, 1
      %p198 = por %p196, %p197
      %p199 = scmp.ne.s32.totalorder %s188, %s189
      %p200 = scmp.eq.s32.totalorder %s34, 0
      %p201 = por %p199, %p200
      %p202 = scmp.ne.s32.totalorder %s188, %s189
      %p203 = scmp.eq.s32.totalorder %s35, 1
      %p204 = por %p202, %p203
      %p206 = scmp.ne.s32.totalorder %s189, %s205
      %p207 = scmp.eq.s32.totalorder %s35, 0
      %p208 = por %p206, %p207
      %s209 = ssub.s32 %s29, %s36
      %p210 = scmp.eq.s32.totalorder %s209, 0
      %s212 = sadd.s32 %s211, 1
      %s213 = scalar_select %p210, %s211, %s212
      %p216 = pneg %p210
      %p217 = scmp.eq.s32.totalorder %s29, 1
      %p218 = por %p216, %p217
      %p219 = scmp.ne.s32.totalorder %s211, %s214
      %p220 = scmp.eq.s32.totalorder %s29, 0
      %p221 = por %p219, %p220
      %p222 = scmp.ne.s32.totalorder %s211, %s214
      %p223 = scmp.eq.s32.totalorder %s34, 1
      %p224 = por %p222, %p223
      %p225 = scmp.ne.s32.totalorder %s214, %s215
      %p226 = scmp.eq.s32.totalorder %s34, 0
      %p227 = por %p225, %p226
      %p228 = scmp.ne.s32.totalorder %s214, %s215
      %p229 = scmp.eq.s32.totalorder %s35, 1
      %p230 = por %p228, %p229
      %p232 = scmp.ne.s32.totalorder %s215, %s231
      %p233 = scmp.eq.s32.totalorder %s35, 0
      %p234 = por %p232, %p233
      %p235 = scmp.le.s32.totalorder 1, %s29
      %p236 = scmp.lt.s32.totalorder %s29, 3
      %p237 = pnand %p235, %p236
      %p238 = pneg %p237
      // Predicated region
      $region9: #{tpu_custom_call.1} parent=5 // pred_check
        _
      $region10: #{tpu_custom_call.1} parent=5 // pred_check_branch
        %240 = sbr.rel (%p237) target = $region12
      $region11: #{tpu_custom_call.1} parent=5 // pred_region
        %s241 = ssub.s32 %s29, 1
        // Predicated region
        $region13: #{tpu_custom_call.1} parent=11 // pred_check
          %p242 = pneg %p154
        $region14: #{tpu_custom_call.1} parent=11 // pred_check_branch
          %244 = sbr.rel (%p242) target = $region16
        $region15: #{tpu_custom_call.1} parent=11 // pred_region
          %246 = vsyncadd [#allocation9], 0
          %s247 = sshll.u32 %s4, 4
          %s248 = int_to_ptr.hbm [resolvable:$true] %s247
          %s249 = sshll.u32 [#allocation10], 4
          %s250 = int_to_ptr.vmem [resolvable:$true] %s249
          %255 = dma.hbm_to_vmem [thread:$0]  %s248, 512, %s250, [#allocation9], 128, 128, 8
        $region16: #{tpu_custom_call.1} parent=11 // pred_fallthru
          _
        // Predicated region
        $region17: #{tpu_custom_call.1} parent=11 // pred_check
          %p256 = pneg %p175
        $region18: #{tpu_custom_call.1} parent=11 // pred_check_branch
          %258 = sbr.rel (%p256) target = $region20
        $region19: #{tpu_custom_call.1} parent=11 // pred_region
          _
        $region20: #{tpu_custom_call.1} parent=11 // pred_fallthru
          _
      $region12: #{tpu_custom_call.1} parent=5 // pred_fallthru
        _
      %p259 = scmp.lt.s32.totalorder %s29, 2
      // Predicated region
      $region21: #{tpu_custom_call.1} parent=5 // pred_check
        %p260 = pneg %p259
      $region22: #{tpu_custom_call.1} parent=5 // pred_check_branch
        %262 = sbr.rel (%p260) target = $region24
      $region23: #{tpu_custom_call.1} parent=5 // pred_region
        // Predicated region
        $region25: #{tpu_custom_call.1} parent=23 // pred_check
          %p263 = pneg %p49
        $region26: #{tpu_custom_call.1} parent=23 // pred_check_branch
          %265 = sbr.rel (%p263) target = $region28
        $region27: #{tpu_custom_call.1} parent=23 // pred_region
          %s266 = sand.u32 %s39, 1
          %s267 = scalar_lea.sflag [#allocation3], %s266
          %s268 = sand.u32 %s39, 1
          %s269 = smul.addr %s268, 32
          %s270 = scalar_lea.vmem [#allocation2], %s269
          %s271 = smul.u32 4, %s29
          %273 = vsyncadd %s267, 0
          %s274 = smul.addr %s271, 8
          %s275 = scalar_lea.hbm %s0, %s274
          %s276 = sshll.u32 %s275, 4
          %s277 = int_to_ptr.hbm [resolvable:$true] %s276
          %s278 = sshll.u32 %s270, 4
          %s279 = int_to_ptr.vmem [resolvable:$true] %s278
          %284 = dma.hbm_to_vmem [thread:$0]  %s277, 512, %s279, %s267, 128, 128, 8
        $region28: #{tpu_custom_call.1} parent=23 // pred_fallthru
          _
        // Predicated region
        $region29: #{tpu_custom_call.1} parent=23 // pred_check
          %p285 = pneg %p75
        $region30: #{tpu_custom_call.1} parent=23 // pred_check_branch
          %287 = sbr.rel (%p285) target = $region32
        $region31: #{tpu_custom_call.1} parent=23 // pred_region
          %s288 = sand.u32 %s29, 1
          %s289 = scalar_lea.sflag [#allocation6], %s288
          %s290 = sand.u32 %s65, 1
          %s291 = smul.addr %s290, 32
          %s292 = scalar_lea.vmem [#allocation5], %s291
          %s293 = smul.u32 4, %s29
          %295 = vsyncadd %s289, 0
          %s296 = smul.addr %s293, 8
          %s297 = scalar_lea.hbm %s1, %s296
          %s298 = sshll.u32 %s297, 4
          %s299 = int_to_ptr.hbm [resolvable:$true] %s298
          %s300 = sshll.u32 %s292, 4
          %s301 = int_to_ptr.vmem [resolvable:$true] %s300
          %306 = dma.hbm_to_vmem [thread:$0]  %s299, 512, %s301, %s289, 128, 128, 8
        $region32: #{tpu_custom_call.1} parent=23 // pred_fallthru
          _
        // Predicated region
        $region33: #{tpu_custom_call.1} parent=23 // pred_check
          %p307 = pneg %p101
        $region34: #{tpu_custom_call.1} parent=23 // pred_check_branch
          %309 = sbr.rel (%p307) target = $region36
        $region35: #{tpu_custom_call.1} parent=23 // pred_region
          %s310 = sand.u32 %s29, 1
          %s311 = scalar_lea.sflag [#allocation6], %s310
          %s312 = sand.u32 %s91, 1
          %s313 = smul.addr %s312, 32
          %s314 = scalar_lea.vmem [#allocation7], %s313
          %s315 = smul.u32 4, %s29
          %317 = vsyncadd %s311, 0
          %s318 = smul.addr %s315, 8
          %s319 = scalar_lea.hbm %s2, %s318
          %s320 = sshll.u32 %s319, 4
          %s321 = int_to_ptr.hbm [resolvable:$true] %s320
          %s322 = sshll.u32 %s314, 4
          %s323 = int_to_ptr.vmem [resolvable:$true] %s322
          %328 = dma.hbm_to_vmem [thread:$0]  %s321, 512, %s323, %s311, 128, 128, 8
        $region36: #{tpu_custom_call.1} parent=23 // pred_fallthru
          _
        // Predicated region
        $region37: #{tpu_custom_call.1} parent=23 // pred_check
          %p329 = pneg %p127
        $region38: #{tpu_custom_call.1} parent=23 // pred_check_branch
          %331 = sbr.rel (%p329) target = $region40
        $region39: #{tpu_custom_call.1} parent=23 // pred_region
          %s332 = sand.u32 %s29, 1
          %s333 = scalar_lea.sflag [#allocation9], %s332
          %s334 = sand.u32 %s117, 1
          %s335 = smul.addr %s334, 8
          %s336 = scalar_lea.vmem [#allocation8], %s335
          %s337 = smul.u32 4, %s29
          %339 = vsyncadd %s333, 0
          %s340 = smul.addr %s337, 2
          %s341 = scalar_lea.hbm %s3, %s340
          %s342 = sshll.u32 %s341, 4
          %s343 = int_to_ptr.hbm [resolvable:$true] %s342
          %s344 = sshll.u32 %s336, 4
          %s345 = int_to_ptr.vmem [resolvable:$true] %s344
          %350 = dma.hbm_to_vmem [thread:$0]  %s343, 128, %s345, %s333, 32, 32, 2
        $region40: #{tpu_custom_call.1} parent=23 // pred_fallthru
          _
      $region24: #{tpu_custom_call.1} parent=5 // pred_fallthru
        _
      %p351 = scmp.le.s32.totalorder 1, %s29
      %p352 = scmp.lt.s32.totalorder %s29, 3
      %p353 = pnand %p351, %p352
      %p354 = pneg %p353
      // Predicated region
      $region41: #{tpu_custom_call.1} parent=5 // pred_check
        _
      $region42: #{tpu_custom_call.1} parent=5 // pred_check_branch
        %356 = sbr.rel (%p353) target = $region44
      $region43: #{tpu_custom_call.1} parent=5 // pred_region
        %s357 = ssub.s32 %s29, 1
        %s358 = sand.u32 %s42, 1
        %s359 = scalar_lea.sflag [#allocation3], %s358
        %s360 = sand.u32 %s42, 1
        %s361 = smul.addr %s360, 32
        %s362 = scalar_lea.vmem [#allocation2], %s361
        // Predicated region
        $region45: #{tpu_custom_call.1} parent=43 // pred_check
          %p363 = pneg %p55
        $region46: #{tpu_custom_call.1} parent=43 // pred_check_branch
          %365 = sbr.rel (%p363) target = $region48
        $region47: #{tpu_custom_call.1} parent=43 // pred_region
          %367 = dma.done %s359, 512
        $region48: #{tpu_custom_call.1} parent=43 // pred_fallthru
          _
        %s368 = sand.u32 %s34, 1
        %s369 = scalar_lea.sflag [#allocation6], %s368
        %s370 = sand.u32 %s68, 1
        %s371 = smul.addr %s370, 32
        %s372 = scalar_lea.vmem [#allocation5], %s371
        // Predicated region
        $region49: #{tpu_custom_call.1} parent=43 // pred_check
          %p373 = pneg %p81
        $region50: #{tpu_custom_call.1} parent=43 // pred_check_branch
          %375 = sbr.rel (%p373) target = $region52
        $region51: #{tpu_custom_call.1} parent=43 // pred_region
          %377 = dma.done %s369, 512
        $region52: #{tpu_custom_call.1} parent=43 // pred_fallthru
          _
        %s378 = sand.u32 %s34, 1
        %s379 = scalar_lea.sflag [#allocation6], %s378
        %s380 = sand.u32 %s94, 1
        %s381 = smul.addr %s380, 32
        %s382 = scalar_lea.vmem [#allocation7], %s381
        // Predicated region
        $region53: #{tpu_custom_call.1} parent=43 // pred_check
          %p383 = pneg %p107
        $region54: #{tpu_custom_call.1} parent=43 // pred_check_branch
          %385 = sbr.rel (%p383) target = $region56
        $region55: #{tpu_custom_call.1} parent=43 // pred_region
          %387 = dma.done %s379, 512
        $region56: #{tpu_custom_call.1} parent=43 // pred_fallthru
          _
        %s388 = sand.u32 %s34, 1
        %s389 = scalar_lea.sflag [#allocation9], %s388
        %s390 = sand.u32 %s120, 1
        %s391 = smul.addr %s390, 8
        %s392 = scalar_lea.vmem [#allocation8], %s391
        // Predicated region
        $region57: #{tpu_custom_call.1} parent=43 // pred_check
          %p393 = pneg %p133
        $region58: #{tpu_custom_call.1} parent=43 // pred_check_branch
          %395 = sbr.rel (%p393) target = $region60
        $region59: #{tpu_custom_call.1} parent=43 // pred_region
          %397 = dma.done %s389, 128
        $region60: #{tpu_custom_call.1} parent=43 // pred_fallthru
          _
        // Predicated region
        $region61: #{tpu_custom_call.1} parent=43 // pred_check
          %p398 = pneg %p154
        $region62: #{tpu_custom_call.1} parent=43 // pred_check_branch
          %400 = sbr.rel (%p398) target = $region64
        $region63: #{tpu_custom_call.1} parent=43 // pred_region
          %402 = dma.done [#allocation9], 512
        $region64: #{tpu_custom_call.1} parent=43 // pred_fallthru
          _
        %s403 = sand.u32 %s42, 1
        %s404 = scalar_lea.sflag [#allocation3], %s403
        %s405 = sand.u32 %s42, 1
        %s406 = smul.addr %s405, 32
        %s407 = scalar_lea.vmem [#allocation2], %s406
        %p408 = pneg %p55
        %p409 = pneg %p52
        %s410 = sand.u32 %s34, 1
        %s411 = scalar_lea.sflag [#allocation6], %s410
        %s412 = sand.u32 %s68, 1
        %s413 = smul.addr %s412, 32
        %s414 = scalar_lea.vmem [#allocation5], %s413
        %p415 = pneg %p81
        %p416 = pneg %p78
        %s417 = sand.u32 %s34, 1
        %s418 = scalar_lea.sflag [#allocation6], %s417
        %s419 = sand.u32 %s94, 1
        %s420 = smul.addr %s419, 32
        %s421 = scalar_lea.vmem [#allocation7], %s420
        %p422 = pneg %p107
        %p423 = pneg %p104
        %s424 = sand.u32 %s34, 1
        %s425 = scalar_lea.sflag [#allocation9], %s424
        %s426 = sand.u32 %s120, 1
        %s427 = smul.addr %s426, 8
        %s428 = scalar_lea.vmem [#allocation8], %s427
        %p429 = pneg %p133
        %p430 = pneg %p130
        %p431 = pneg %p154
        %p432 = pneg %p151
        %p433 = pneg %p175
        %p434 = pneg %p172
        %p435 = pneg %p201
        %p436 = pneg %p198
        %s437 = sand.u32 %s188, 1
        %s438 = scalar_lea.sflag [#allocation4], %s437
        %s439 = sand.u32 %s188, 1
        %s440 = smul.addr %s439, 32
        %s441 = scalar_lea.vmem [#allocation11], %s440
        %p442 = pneg %p227
        %p443 = pneg %p224
        %s444 = sand.u32 %s214, 1
        %s445 = scalar_lea.sflag [#allocation13], %s444
        %s446 = sand.u32 %s214, 1
        %s447 = smul.addr %s446, 32
        %s448 = scalar_lea.vmem [#allocation12], %s447
        %s449 = smul.u32 4, %s34
        %s450 = smul.u32 4, %s34
        %s451 = smul.u32 4, %s34
        %s452 = smul.u32 4, %s34
        %s453 = smul.u32 4, %s34
        %s454 = smul.u32 4, %s34
        %v455 = vld [vmem:[%s362] sm:$0xff]
        %v456 = vld [vmem:[%s362 + $0x8] sm:$0xff]
        %v457 = vld [vmem:[%s362 + $0x10] sm:$0xff]
        %v458 = vld [vmem:[%s362 + $0x18] sm:$0xff]
        %v459 = vld [vmem:[%s372] sm:$0xff]
        %v460 = vld [vmem:[%s372 + $0x8] sm:$0xff]
        %v461 = vld [vmem:[%s372 + $0x10] sm:$0xff]
        %v462 = vld [vmem:[%s372 + $0x18] sm:$0xff]
        %v463 = vld [vmem:[%s382] sm:$0xff]
        %v464 = vld [vmem:[%s382 + $0x8] sm:$0xff]
        %v465 = vld [vmem:[%s382 + $0x10] sm:$0xff]
        %v466 = vld [vmem:[%s382 + $0x18] sm:$0xff]
        %v467 = vld [vmem:[%s392] sm:$0x3]
        %v468 = vld [vmem:[%s392 + $0x2] sm:$0x3]
        %v469 = vld [vmem:[%s392 + $0x4] sm:$0x3]
        %v470 = vld [vmem:[%s392 + $0x6] sm:$0x3]
        %v471 = vunpack.c.0.s8 %v467
        %v472 = vunpack.c.0.s8 %v468
        %v473 = vunpack.c.0.s8 %v469
        %v474 = vunpack.c.0.s8 %v470
        %v475 = vcvt.s32.f32 %v471
        %v476 = vcvt.s32.f32 %v472
        %v477 = vcvt.s32.f32 %v473
        %v478 = vcvt.s32.f32 %v474
        %v479 = vld [vmem:[#allocation10] sm:$0xff]
        %v480 = vld [vmem:[#allocation10 + $0x8] sm:$0xff]
        %v481 = vld [vmem:[#allocation10 + $0x10] sm:$0xff]
        %v482 = vld [vmem:[#allocation10 + $0x18] sm:$0xff]
        %v483 = vld [vmem:[%s5] sm:$0x1]
        %v485 = vperm.slane %v483, 0
        %vm487 = vcmask 261120
        %v489 = vsel %vm487, %v455, 0
        %v492 = vsel %vm487, %v456, 0
        %v495 = vsel %vm487, %v457, 0
        %v498 = vsel %vm487, %v458, 0
        %500 = vmatpush.msra.mxu0 0.0
        %501 = vmatpush.msra.mxu0 0.0
        %502 = vmatpush.msra.mxu0 0.0
        %503 = vmatpush.msra.mxu0 0.0
        %504 = vmatpush.msra.mxu0 0.0
        %505 = vmatpush.msra.mxu0 0.0
        %506 = vmatpush.msra.mxu0 0.0
        %507 = vmatpush.msra.mxu0 0.0
        %508 = vmatpush.msra.mxu0 0.0
        %509 = vmatpush.msra.mxu0 0.0
        %510 = vmatpush.msra.mxu0 0.0
        %511 = vmatpush.msra.mxu0 0.0
        %512 = vmatpush.msra.mxu0 %v482
        %513 = vmatpush.msra.mxu0 %v481
        %514 = vmatpush.msra.mxu0 %v480
        %515 = vmatpush.msra.mxu0 %v479
        %516 = vmatmul.f32.gmra.mxu0 %v489
        %v517 = vpop.f32.mrf.mxu0
        %v518 = vadd.f32 %v485, %v517
        %519 = vmatmul.f32.gmra.mxu0 %v492
        %v520 = vpop.f32.mrf.mxu0
        %v521 = vadd.f32 %v485, %v520
        %522 = vmatmul.f32.gmra.mxu0 %v495
        %v523 = vpop.f32.mrf.mxu0
        %v524 = vadd.f32 %v485, %v523
        %525 = vmatmul.f32.gmra.mxu0 %v498
        %v526 = vpop.f32.mrf.mxu0
        %v527 = vadd.f32 %v485, %v526
        %528 = vdwg.mxu0
        %v530 = vsel %vm487, %v518, 0
        %v533 = vsel %vm487, %v459, 0
        %535 = vmatpush.xpose.msra.mxu0 0.0
        %536 = vmatpush.xpose.msra.mxu0 0.0
        %537 = vmatpush.xpose.msra.mxu0 0.0
        %538 = vmatpush.xpose.msra.mxu0 0.0
        %539 = vmatpush.xpose.msra.mxu0 0.0
        %540 = vmatpush.xpose.msra.mxu0 0.0
        %541 = vmatpush.xpose.msra.mxu0 0.0
        %542 = vmatpush.xpose.msra.mxu0 0.0
        %543 = vmatpush.xpose.msra.mxu0 0.0
        %544 = vmatpush.xpose.msra.mxu0 0.0
        %545 = vmatpush.xpose.msra.mxu0 0.0
        %546 = vmatpush.xpose.msra.mxu0 0.0
        %547 = vmatpush.xpose.msra.mxu0 0.0
        %548 = vmatpush.xpose.msra.mxu0 0.0
        %549 = vmatpush.xpose.msra.mxu0 0.0
        %550 = vmatpush.xpose.msra.mxu0 %v533
        %551 = vmatmul.f32.gmra.mxu0 %v530
        %v552 = vpop.f32.mrf.mxu0
        %v553 = vadd.f32 0.0, %v552
        %554 = vdwg.mxu0
        %v556 = vsel %vm487, %v521, 0
        %v559 = vsel %vm487, %v460, 0
        %561 = vmatpush.xpose.msra.mxu0 0.0
        %562 = vmatpush.xpose.msra.mxu0 0.0
        %563 = vmatpush.xpose.msra.mxu0 0.0
        %564 = vmatpush.xpose.msra.mxu0 0.0
        %565 = vmatpush.xpose.msra.mxu0 0.0
        %566 = vmatpush.xpose.msra.mxu0 0.0
        %567 = vmatpush.xpose.msra.mxu0 0.0
        %568 = vmatpush.xpose.msra.mxu0 0.0
        %569 = vmatpush.xpose.msra.mxu0 0.0
        %570 = vmatpush.xpose.msra.mxu0 0.0
        %571 = vmatpush.xpose.msra.mxu0 0.0
        %572 = vmatpush.xpose.msra.mxu0 0.0
        %573 = vmatpush.xpose.msra.mxu0 0.0
        %574 = vmatpush.xpose.msra.mxu0 0.0
        %575 = vmatpush.xpose.msra.mxu0 0.0
        %576 = vmatpush.xpose.msra.mxu0 %v559
        %577 = vmatmul.f32.gmra.mxu0 %v556
        %v578 = vpop.f32.mrf.mxu0
        %v579 = vadd.f32 0.0, %v578
        %580 = vdwg.mxu0
        %v582 = vsel %vm487, %v524, 0
        %v585 = vsel %vm487, %v461, 0
        %587 = vmatpush.xpose.msra.mxu0 0.0
        %588 = vmatpush.xpose.msra.mxu0 0.0
        %589 = vmatpush.xpose.msra.mxu0 0.0
        %590 = vmatpush.xpose.msra.mxu0 0.0
        %591 = vmatpush.xpose.msra.mxu0 0.0
        %592 = vmatpush.xpose.msra.mxu0 0.0
        %593 = vmatpush.xpose.msra.mxu0 0.0
        %594 = vmatpush.xpose.msra.mxu0 0.0
        %595 = vmatpush.xpose.msra.mxu0 0.0
        %596 = vmatpush.xpose.msra.mxu0 0.0
        %597 = vmatpush.xpose.msra.mxu0 0.0
        %598 = vmatpush.xpose.msra.mxu0 0.0
        %599 = vmatpush.xpose.msra.mxu0 0.0
        %600 = vmatpush.xpose.msra.mxu0 0.0
        %601 = vmatpush.xpose.msra.mxu0 0.0
        %602 = vmatpush.xpose.msra.mxu0 %v585
        %603 = vmatmul.f32.gmra.mxu0 %v582
        %v604 = vpop.f32.mrf.mxu0
        %v605 = vadd.f32 0.0, %v604
        %606 = vdwg.mxu0
        %v608 = vsel %vm487, %v527, 0
        %v611 = vsel %vm487, %v462, 0
        %613 = vmatpush.xpose.msra.mxu0 0.0
        %614 = vmatpush.xpose.msra.mxu0 0.0
        %615 = vmatpush.xpose.msra.mxu0 0.0
        %616 = vmatpush.xpose.msra.mxu0 0.0
        %617 = vmatpush.xpose.msra.mxu0 0.0
        %618 = vmatpush.xpose.msra.mxu0 0.0
        %619 = vmatpush.xpose.msra.mxu0 0.0
        %620 = vmatpush.xpose.msra.mxu0 0.0
        %621 = vmatpush.xpose.msra.mxu0 0.0
        %622 = vmatpush.xpose.msra.mxu0 0.0
        %623 = vmatpush.xpose.msra.mxu0 0.0
        %624 = vmatpush.xpose.msra.mxu0 0.0
        %625 = vmatpush.xpose.msra.mxu0 0.0
        %626 = vmatpush.xpose.msra.mxu0 0.0
        %627 = vmatpush.xpose.msra.mxu0 0.0
        %628 = vmatpush.xpose.msra.mxu0 %v611
        %629 = vmatmul.f32.gmra.mxu0 %v608
        %v630 = vpop.f32.mrf.mxu0
        %v631 = vadd.f32 0.0, %v630
        %632 = vdwg.mxu0
        %vm633 = vcmp.ne.f32.partialorder %v475, 0.0
        %vm634 = vcmp.ne.f32.partialorder %v476, 0.0
        %vm635 = vcmp.ne.f32.partialorder %v477, 0.0
        %vm636 = vcmp.ne.f32.partialorder %v478, 0.0
        %v637 = vsel %vm633, 0.0, %v553
        %v638 = vsel %vm634, 0.0, %v579
        %v639 = vsel %vm635, 0.0, %v605
        %v640 = vsel %vm636, 0.0, %v631
        %vm641 = vcmask 64512
        %v642 = vsel %vm641, %v637, -inf
        %643 = vmax.xlane.f32.xlu0 %v642
        %v644 = vpop.xlane.xlu0 %643
        %v645 = vsel %vm641, %v638, -inf
        %646 = vmax.xlane.f32.xlu0 %v645
        %v647 = vpop.xlane.xlu0 %646
        %v648 = vsel %vm641, %v639, -inf
        %649 = vmax.xlane.f32.xlu0 %v648
        %v650 = vpop.xlane.xlu0 %649
        %v651 = vsel %vm641, %v640, -inf
        %652 = vmax.xlane.f32.xlu0 %v651
        %v653 = vpop.xlane.xlu0 %652
        %v654 = vsub.f32 %v637, %v644
        %v655 = vsub.f32 %v638, %v647
        %v656 = vsub.f32 %v639, %v650
        %v657 = vsub.f32 %v640, %v653
        %v658 = vmul.f32 %v654, 1.442695
        %v659 = vpow.pop %v658
        %v660 = vmul.f32 %v655, 1.442695
        %v661 = vpow.pop %v660
        %v662 = vmul.f32 %v656, 1.442695
        %v663 = vpow.pop %v662
        %v664 = vmul.f32 %v657, 1.442695
        %v665 = vpow.pop %v664
        %v666 = vsel %vm641, %v659, 0.0
        %667 = vadd.xlane.f32.xlu0 %v666
        %v668 = vpop.xlane.xlu0 %667
        %v669 = vsel %vm641, %v661, 0.0
        %670 = vadd.xlane.f32.xlu0 %v669
        %v671 = vpop.xlane.xlu0 %670
        %v672 = vsel %vm641, %v663, 0.0
        %673 = vadd.xlane.f32.xlu0 %v672
        %v674 = vpop.xlane.xlu0 %673
        %v675 = vsel %vm641, %v665, 0.0
        %676 = vadd.xlane.f32.xlu0 %v675
        %v677 = vpop.xlane.xlu0 %676
        %v678 = vrcp.pop %v668
        %v679 = vmul.f32 %v668, %v678
        %v680 = vsub.f32 1.0, %v679
        %v681 = vmul.f32 %v678, %v680
        %v682 = vadd.f32 %v678, %v681
        %vm683 = vweird.f32 %v668
        %vm684 = vweird.f32 %v678
        %vm685 = vmor %vm683, %vm684
        %v686 = vsel %vm685, %v678, %v682
        %v687 = vand.u32 2147483647, %v668
        %vm688 = vcmp.eq.f32.partialorder %v687, 8.507059e+37
        %v689 = vand.u32 %v668, 2147483648
        %v690 = vor.u32 1.1754944e-38, %v689
        %v691 = vsel %vm688, %v690, %v686
        %v692 = vrcp.pop %v671
        %v693 = vmul.f32 %v671, %v692
        %v694 = vsub.f32 1.0, %v693
        %v695 = vmul.f32 %v692, %v694
        %v696 = vadd.f32 %v692, %v695
        %vm697 = vweird.f32 %v671
        %vm698 = vweird.f32 %v692
        %vm699 = vmor %vm697, %vm698
        %v700 = vsel %vm699, %v692, %v696
        %v701 = vand.u32 2147483647, %v671
        %vm702 = vcmp.eq.f32.partialorder %v701, 8.507059e+37
        %v703 = vand.u32 %v671, 2147483648
        %v704 = vor.u32 1.1754944e-38, %v703
        %v705 = vsel %vm702, %v704, %v700
        %v706 = vrcp.pop %v674
        %v707 = vmul.f32 %v674, %v706
        %v708 = vsub.f32 1.0, %v707
        %v709 = vmul.f32 %v706, %v708
        %v710 = vadd.f32 %v706, %v709
        %vm711 = vweird.f32 %v674
        %vm712 = vweird.f32 %v706
        %vm713 = vmor %vm711, %vm712
        %v714 = vsel %vm713, %v706, %v710
        %v715 = vand.u32 2147483647, %v674
        %vm716 = vcmp.eq.f32.partialorder %v715, 8.507059e+37
        %v717 = vand.u32 %v674, 2147483648
        %v718 = vor.u32 1.1754944e-38, %v717
        %v719 = vsel %vm716, %v718, %v714
        %v720 = vrcp.pop %v677
        %v721 = vmul.f32 %v677, %v720
        %v722 = vsub.f32 1.0, %v721
        %v723 = vmul.f32 %v720, %v722
        %v724 = vadd.f32 %v720, %v723
        %vm725 = vweird.f32 %v677
        %vm726 = vweird.f32 %v720
        %vm727 = vmor %vm725, %vm726
        %v728 = vsel %vm727, %v720, %v724
        %v729 = vand.u32 2147483647, %v677
        %vm730 = vcmp.eq.f32.partialorder %v729, 8.507059e+37
        %v731 = vand.u32 %v677, 2147483648
        %v732 = vor.u32 1.1754944e-38, %v731
        %v733 = vsel %vm730, %v732, %v728
        %v734 = vmul.f32 %v659, %v691
        %v735 = vmul.f32 %v661, %v705
        %v736 = vmul.f32 %v663, %v719
        %v737 = vmul.f32 %v665, %v733
        %738 = vst.msk [vmem:[%s448] sm:$0xff] %vm641, %v734
        %739 = vst.msk [vmem:[%s448 + $0x8] sm:$0xff] %vm641, %v735
        %740 = vst.msk [vmem:[%s448 + $0x10] sm:$0xff] %vm641, %v736
        %741 = vst.msk [vmem:[%s448 + $0x18] sm:$0xff] %vm641, %v737
        %v743 = vsel %vm641, %v734, 0
        %745 = vmatpush.msra.mxu0 0.0
        %746 = vmatpush.msra.mxu0 0.0
        %747 = vmatpush.msra.mxu0 0.0
        %748 = vmatpush.msra.mxu0 0.0
        %749 = vmatpush.msra.mxu0 0.0
        %750 = vmatpush.msra.mxu0 0.0
        %751 = vmatpush.msra.mxu0 0.0
        %752 = vmatpush.msra.mxu0 0.0
        %753 = vmatpush.msra.mxu0 0.0
        %754 = vmatpush.msra.mxu0 0.0
        %755 = vmatpush.msra.mxu0 0.0
        %756 = vmatpush.msra.mxu0 0.0
        %757 = vmatpush.msra.mxu0 0.0
        %758 = vmatpush.msra.mxu0 0.0
        %759 = vmatpush.msra.mxu0 0.0
        %760 = vmatpush.msra.mxu0 %v463
        %761 = vmatmul.f32.gmra.mxu0 %v743
        %v762 = vpop.f32.mrf.mxu0
        %v763 = vadd.f32 0.0, %v762
        %764 = vdwg.mxu0
        %v766 = vsel %vm641, %v735, 0
        %768 = vmatpush.msra.mxu0 0.0
        %769 = vmatpush.msra.mxu0 0.0
        %770 = vmatpush.msra.mxu0 0.0
        %771 = vmatpush.msra.mxu0 0.0
        %772 = vmatpush.msra.mxu0 0.0
        %773 = vmatpush.msra.mxu0 0.0
        %774 = vmatpush.msra.mxu0 0.0
        %775 = vmatpush.msra.mxu0 0.0
        %776 = vmatpush.msra.mxu0 0.0
        %777 = vmatpush.msra.mxu0 0.0
        %778 = vmatpush.msra.mxu0 0.0
        %779 = vmatpush.msra.mxu0 0.0
        %780 = vmatpush.msra.mxu0 0.0
        %781 = vmatpush.msra.mxu0 0.0
        %782 = vmatpush.msra.mxu0 0.0
        %783 = vmatpush.msra.mxu0 %v464
        %784 = vmatmul.f32.gmra.mxu0 %v766
        %v785 = vpop.f32.mrf.mxu0
        %v786 = vadd.f32 0.0, %v785
        %787 = vdwg.mxu0
        %v789 = vsel %vm641, %v736, 0
        %791 = vmatpush.msra.mxu0 0.0
        %792 = vmatpush.msra.mxu0 0.0
        %793 = vmatpush.msra.mxu0 0.0
        %794 = vmatpush.msra.mxu0 0.0
        %795 = vmatpush.msra.mxu0 0.0
        %796 = vmatpush.msra.mxu0 0.0
        %797 = vmatpush.msra.mxu0 0.0
        %798 = vmatpush.msra.mxu0 0.0
        %799 = vmatpush.msra.mxu0 0.0
        %800 = vmatpush.msra.mxu0 0.0
        %801 = vmatpush.msra.mxu0 0.0
        %802 = vmatpush.msra.mxu0 0.0
        %803 = vmatpush.msra.mxu0 0.0
        %804 = vmatpush.msra.mxu0 0.0
        %805 = vmatpush.msra.mxu0 0.0
        %806 = vmatpush.msra.mxu0 %v465
        %807 = vmatmul.f32.gmra.mxu0 %v789
        %v808 = vpop.f32.mrf.mxu0
        %v809 = vadd.f32 0.0, %v808
        %810 = vdwg.mxu0
        %v812 = vsel %vm641, %v737, 0
        %814 = vmatpush.msra.mxu0 0.0
        %815 = vmatpush.msra.mxu0 0.0
        %816 = vmatpush.msra.mxu0 0.0
        %817 = vmatpush.msra.mxu0 0.0
        %818 = vmatpush.msra.mxu0 0.0
        %819 = vmatpush.msra.mxu0 0.0
        %820 = vmatpush.msra.mxu0 0.0
        %821 = vmatpush.msra.mxu0 0.0
        %822 = vmatpush.msra.mxu0 0.0
        %823 = vmatpush.msra.mxu0 0.0
        %824 = vmatpush.msra.mxu0 0.0
        %825 = vmatpush.msra.mxu0 0.0
        %826 = vmatpush.msra.mxu0 0.0
        %827 = vmatpush.msra.mxu0 0.0
        %828 = vmatpush.msra.mxu0 0.0
        %829 = vmatpush.msra.mxu0 %v466
        %830 = vmatmul.f32.gmra.mxu0 %v812
        %v831 = vpop.f32.mrf.mxu0
        %v832 = vadd.f32 0.0, %v831
        %833 = vdwg.mxu0
        %834 = vst.msk [vmem:[%s441] sm:$0xff] %vm487, %v763
        %835 = vst.msk [vmem:[%s441 + $0x8] sm:$0xff] %vm487, %v786
        %836 = vst.msk [vmem:[%s441 + $0x10] sm:$0xff] %vm487, %v809
        %837 = vst.msk [vmem:[%s441 + $0x18] sm:$0xff] %vm487, %v832
        %s838 = sand.u32 %s188, 1
        %s839 = scalar_lea.sflag [#allocation4], %s838
        %s840 = sand.u32 %s188, 1
        %s841 = smul.addr %s840, 32
        %s842 = scalar_lea.vmem [#allocation11], %s841
        %s843 = sand.u32 %s214, 1
        %s844 = scalar_lea.sflag [#allocation13], %s843
        %s845 = sand.u32 %s214, 1
        %s846 = smul.addr %s845, 32
        %s847 = scalar_lea.vmem [#allocation12], %s846
        // Predicated region
        $region65: #{tpu_custom_call.1} parent=43 // pred_check
          %p848 = pneg %p198
        $region66: #{tpu_custom_call.1} parent=43 // pred_check_branch
          %850 = sbr.rel (%p848) target = $region68
        $region67: #{tpu_custom_call.1} parent=43 // pred_region
          %s851 = smul.u32 4, %s34
          %853 = vsyncadd %s839, 0
          %s854 = smul.addr %s851, 8
          %s855 = scalar_lea.hbm %s6, %s854
          %s856 = sshll.u32 %s842, 4
          %s857 = int_to_ptr.vmem [resolvable:$true] %s856
          %s858 = sshll.u32 %s855, 4
          %s859 = int_to_ptr.hbm [resolvable:$true] %s858
          %864 = dma.vmem_to_hbm [thread:$0]  %s857, 512, %s859, %s839, 128, 128, 8
        $region68: #{tpu_custom_call.1} parent=43 // pred_fallthru
          _
        // Predicated region
        $region69: #{tpu_custom_call.1} parent=43 // pred_check
          %p865 = pneg %p224
        $region70: #{tpu_custom_call.1} parent=43 // pred_check_branch
          %867 = sbr.rel (%p865) target = $region72
        $region71: #{tpu_custom_call.1} parent=43 // pred_region
          %s868 = smul.u32 4, %s34
          %870 = vsyncadd %s844, 0
          %s871 = smul.addr %s868, 8
          %s872 = scalar_lea.hbm %s7, %s871
          %s873 = sshll.u32 %s847, 4
          %s874 = int_to_ptr.vmem [resolvable:$true] %s873
          %s875 = sshll.u32 %s872, 4
          %s876 = int_to_ptr.hbm [resolvable:$true] %s875
          %881 = dma.vmem_to_hbm [thread:$0]  %s874, 512, %s876, %s844, 128, 128, 8
        $region72: #{tpu_custom_call.1} parent=43 // pred_fallthru
          _
      $region44: #{tpu_custom_call.1} parent=5 // pred_fallthru
        _
      %p882 = scmp.le.s32.totalorder 2, %s29
      // Predicated region
      $region73: #{tpu_custom_call.1} parent=5 // pred_check
        %p883 = pneg %p882
      $region74: #{tpu_custom_call.1} parent=5 // pred_check_branch
        %885 = sbr.rel (%p883) target = $region76
      $region75: #{tpu_custom_call.1} parent=5 // pred_region
        %s886 = ssub.s32 %s29, 2
        // Predicated region
        $region77: #{tpu_custom_call.1} parent=75 // pred_check
          %p887 = pneg %p204
        $region78: #{tpu_custom_call.1} parent=75 // pred_check_branch
          %889 = sbr.rel (%p887) target = $region80
        $region79: #{tpu_custom_call.1} parent=75 // pred_region
          %s890 = sand.u32 %s189, 1
          %s891 = scalar_lea.sflag [#allocation4], %s890
          %s892 = sand.u32 %s189, 1
          %s893 = smul.addr %s892, 32
          %s894 = scalar_lea.vmem [#allocation11], %s893
          %896 = dma.done %s891, 512
        $region80: #{tpu_custom_call.1} parent=75 // pred_fallthru
          _
        // Predicated region
        $region81: #{tpu_custom_call.1} parent=75 // pred_check
          %p897 = pneg %p230
        $region82: #{tpu_custom_call.1} parent=75 // pred_check_branch
          %899 = sbr.rel (%p897) target = $region84
        $region83: #{tpu_custom_call.1} parent=75 // pred_region
          %s900 = sand.u32 %s215, 1
          %s901 = scalar_lea.sflag [#allocation13], %s900
          %s902 = sand.u32 %s215, 1
          %s903 = smul.addr %s902, 32
          %s904 = scalar_lea.vmem [#allocation12], %s903
          %906 = dma.done %s901, 512
        $region84: #{tpu_custom_call.1} parent=75 // pred_fallthru
          _
      $region76: #{tpu_custom_call.1} parent=5 // pred_fallthru
        _
    $region6: #{tpu_custom_call.1} parent=1 // loop_footer
      %s33 = sadd.s32 1, %s29
    $region7: #{tpu_custom_call.1} parent=1 // loop_footer_branch
      %28 = sbr.rel target = $region3
    $region8: #{tpu_custom_call.1} parent=1 // loop_exit
      _
    %907 = vsyncpa [#allocation3], 1
    %s908 = scalar_lea.sflag [#allocation3], 1
    %909 = vsyncpa %s908, 1
    %910 = vsyncpa [#allocation6], 1
    %s911 = scalar_lea.sflag [#allocation6], 1
    %912 = vsyncpa %s911, 1
    %913 = vsyncpa [#allocation9], 1
    %s914 = scalar_lea.sflag [#allocation9], 1
    %915 = vsyncpa %s914, 1
    %916 = vsyncpa [#allocation4], 1
    %s917 = scalar_lea.sflag [#allocation4], 1
    %918 = vsyncpa %s917, 1
    %919 = vsyncpa [#allocation13], 1
    %s920 = scalar_lea.sflag [#allocation13], 1
    %921 = vsyncpa %s920, 1

</llo_original>
